<compile_context>
chip_gen: v5e
topology: v5e:2x2
jax: 0.10.0
libtpu: 0.0.40
codegen_flags: <defaults>
</compile_context>

<pallas_src>
import math

import jax
import jax.numpy as jnp
from jax import lax
from jax.experimental import pallas as pl
from jax.experimental.pallas import tpu as pltpu

LANE = 128


def _round_up(n, m):
    return ((n + m - 1) // m) * m


# ---------------------------------------------------------------------------
# Kernel: fused (embedding gather + flatten + fc1 + b1) -> ReLU -> (fc2 + b2)
# ---------------------------------------------------------------------------
def surname_mlp_kernel(x_ref, vcol_ref, r_ref, t_ref, w2_ref, out_ref):
    """One batch tile.

    x_ref    : (TB, L)   int32 character indices
    vcol_ref : (1, K)    f32 per-column vocab id, K = L*Vp (resident)
    r_ref    : (L, K)    f32 0/1 spread matrix (resident)
    t_ref    : (K, Hp)   folded tables (b1 + b2-carrier included, resident)
    w2_ref   : (Hp, Cp)  fc2 weight (b2 in carrier row, resident)
    out_ref  : (TB, C)   logits, f32, unpadded class dim
    """
    cdt = t_ref.dtype                                     # bf16 or f32
    C = out_ref.shape[1]

    # Replicate each index across its Vp lanes with one tiny MXU matmul
    # (R has exactly one 1.0 per column -> result is the index, exactly).
    xf = x_ref[...].astype(jnp.float32)                   # (TB, L)
    tgt = jnp.dot(xf, r_ref[...],
                  preferred_element_type=jnp.float32)     # (TB, K)

    # Lane-dense one-hot: onehot[b, l*Vp+v] = (x[b,l] == v).  Distinct integer
    # targets differ by >= 1, so a +-0.5 window is an exact-equality test with
    # headroom against any matmul rounding.
    onehot = (jnp.abs(tgt - vcol_ref[...]) < 0.5).astype(cdt)   # (TB, K)

    # Fused gather + flatten + fc1 + b1 in a single K-wide MXU matmul, then
    # ReLU.  Dropout(p=0.3) is identity in eval mode.
    # TODO(synk): a training-mode kernel would mask here with
    # pltpu.prng_seed / pltpu.prng_random_bits.
    h = jnp.dot(onehot, t_ref[...], preferred_element_type=jnp.float32)
    h = jnp.maximum(h, 0.0)                               # (TB, Hp), carrier col == 1

    # fc2 (+ b2 via the carrier row); store only the real C logit columns.
    logits = jnp.dot(h.astype(cdt), w2_ref[...],
                     preferred_element_type=jnp.float32)  # (TB, Cp)
    out_ref[...] = logits[:, :C].astype(out_ref.dtype)


# ---------------------------------------------------------------------------
# Parameter preparation (done once): fold emb+fc1+biases, pad lane-dense.
# ---------------------------------------------------------------------------
def prepare_params(emb, w1, b1, w2, b2, *, seq_len=20,
                   compute_dtype=jnp.bfloat16):
    """emb:(V,E) row 0 zero; w1:(E*seq_len,H); b1:(H,); w2:(H,C); b2:(C,)."""
    V, E = emb.shape
    K_in, H = w1.shape
    assert K_in == E * seq_len
    C = w2.shape[1]
    L = seq_len

    # Pad vocab so K = L*Vp is a multiple of 128 (lane-dense one-hot / matmul K).
    g = math.gcd(L, LANE)
    Vp = _round_up(V, LANE // g)
    K = L * Vp
    Hp = _round_up(H + 1, LANE)      # +1 reserves a constant-1 carrier column
    Cp = _round_up(C, LANE)

    emb_p = jnp.pad(emb.astype(jnp.float32), ((0, Vp - V), (0, 0)))     # (Vp,E)
    w1_p = jnp.pad(w1.astype(jnp.float32), ((0, 0), (0, Hp - H)))       # (L*E,Hp)

    # T[l, v, h] = sum_e emb[v, e] * w1[l*E + e, h]
    t = jnp.einsum('ve,leh->lvh', emb_p, w1_p.reshape(L, E, Hp),
                   precision=lax.Precision.HIGHEST)                     # (L,Vp,Hp)
    # Fold fc1 bias into position 0 (exactly one one-hot fires per position).
    b1_p = jnp.pad(b1.astype(jnp.float32), (0, Hp - H))
    t = t.at[0, :, :].add(b1_p)
    # Constant-1 carrier column (last padded hidden col) carries b2 through fc2.
    t = t.at[0, :, Hp - 1].set(1.0)
    t_flat = t.reshape(K, Hp)        # row index k = l*Vp + v

    w2_p = jnp.pad(w2.astype(jnp.float32), ((0, Hp - H), (0, Cp - C)))
    b2_p = jnp.pad(b2.astype(jnp.float32), (0, Cp - C))
    w2_p = w2_p.at[Hp - 1, :].set(b2_p)

    # Spread matrix R[l, k] = 1 iff k // Vp == l  (replicates x[:, l] over Vp lanes).
    l_of_k = jnp.arange(K) // Vp
    spread = (l_of_k[None, :] == jnp.arange(L)[:, None]).astype(jnp.float32)
    # Per-column vocab id for the one-hot compare.
    vcol = (jnp.arange(K) % Vp).astype(jnp.float32).reshape(1, K)

    return {
        "T": t_flat.astype(compute_dtype),
        "W2": w2_p.astype(compute_dtype),
        "R": spread,
        "VCOL": vcol,
        "num_classes": C,
        "seq_len": L,
    }


# ---------------------------------------------------------------------------
# Batch-tile selection: big tiles, small padding waste, >=2 steps if possible.
# ---------------------------------------------------------------------------
def _choose_tile(B, tile_b_max):
    bp8 = _round_up(max(B, 1), 8)
    n_steps = pl.cdiv(bp8, tile_b_max)
    if bp8 >= 16:                      # v7x megacore: give it >= 2 grid steps
        n_steps = max(n_steps, 2)
    tb = _round_up(pl.cdiv(bp8, n_steps), 8)
    grid = pl.cdiv(bp8, tb)
    return tb, grid, grid * tb


# ---------------------------------------------------------------------------
# Forward wrapper
# ---------------------------------------------------------------------------
def surname_mlp_forward(x, params, *, tile_b=1024):
    """x: (B, seq_len) integer indices -> logits (B, num_classes) f32."""
    t, w2, r, vcol = params["T"], params["W2"], params["R"], params["VCOL"]
    C, L = params["num_classes"], params["seq_len"]
    K, Hp = t.shape
    Cp = w2.shape[1]
    assert x.shape[1] == L

    x = x.astype(jnp.int32)
    B = x.shape[0]
    tb, grid, bp = _choose_tile(B, tile_b)
    if bp != B:                         # pad ragged batch with padding_idx=0
        x = jnp.pad(x, ((0, bp - B), (0, 0)))

    out = pl.pallas_call(
        surname_mlp_kernel,
        out_shape=jax.ShapeDtypeStruct((bp, C), jnp.float32),
        grid_spec=pltpu.PrefetchScalarGridSpec(
            num_scalar_prefetch=0,
            grid=(grid,),
            in_specs=[
                pl.BlockSpec((tb, L), lambda i: (i, 0)),    # x: batch-tiled
                pl.BlockSpec((1, K), lambda i: (0, 0)),     # vocab-id cols: resident
                pl.BlockSpec((L, K), lambda i: (0, 0)),     # spread matrix: resident
                pl.BlockSpec((K, Hp), lambda i: (0, 0)),    # folded fc1 table: resident
                pl.BlockSpec((Hp, Cp), lambda i: (0, 0)),   # fc2 weight: resident
            ],
            out_specs=pl.BlockSpec((tb, C), lambda i: (i, 0)),
        ),
        compiler_params=pltpu.CompilerParams(
            dimension_semantics=("parallel",),    # v7x: shard tiles over 2 TCs
            vmem_limit_bytes=32 * 1024 * 1024,
        ),
    )(x, vcol, r, t, w2)

    return out if bp == B else out[:B]


# ---------------------------------------------------------------------------
# Pure-JAX reference (eval-mode dropout = identity) and parameter init
# ---------------------------------------------------------------------------
def surname_mlp_reference(x, emb, w1, b1, w2, b2):
    B = x.shape[0]
    flat = jnp.take(emb, x, axis=0).reshape(B, -1)
    h = jnp.maximum(
        jnp.dot(flat, w1, precision=lax.Precision.HIGHEST) + b1, 0.0)
    return jnp.dot(h, w2, precision=lax.Precision.HIGHEST) + b2


def init_params(key, vocab_size, embedding_dim, hidden_dim, num_nationalities,
                max_len=20):
    k_emb, k_w1, k_b1, k_w2, k_b2 = jax.random.split(key, 5)
    emb = 0.1 * jax.random.normal(k_emb, (vocab_size, embedding_dim),
                                  dtype=jnp.float32)
    emb = emb.at[0].set(0.0)             # padding_idx=0 -> zero row
    in1 = embedding_dim * max_len
    w1 = 0.1 * jax.random.normal(k_w1, (in1, hidden_dim), dtype=jnp.float32)
    b1 = 0.1 * jax.random.normal(k_b1, (hidden_dim,), dtype=jnp.float32)
    w2 = 0.1 * jax.random.normal(k_w2, (hidden_dim, num_nationalities),
                                 dtype=jnp.float32)
    b2 = 0.1 * jax.random.normal(k_b2, (num_nationalities,), dtype=jnp.float32)
    return emb, w1, b1, w2, b2


if __name__ == "__main__":
    vocab_size = 32
    embedding_dim = 16
    hidden_dim = 32
    num_nationalities = 8
    max_surname_length = 20   # implied by fc1 in_features = embedding_dim * 20
    batch = 8

    key = jax.random.PRNGKey(0)
    k_params, k_x, k_x2 = jax.random.split(key, 3)
    emb, w1, b1, w2, b2 = init_params(
        k_params, vocab_size, embedding_dim, hidden_dim, num_nationalities,
        max_len=max_surname_length)
    x = jax.random.randint(k_x, (batch, max_surname_length), 0, vocab_size,
                           dtype=jnp.int32)
    ref = surname_mlp_reference(x, emb, w1, b1, w2, b2)

    # Production path: bf16 MXU operands / f32 accumulation.
    params_bf16 = prepare_params(emb, w1, b1, w2, b2,
                                 seq_len=max_surname_length,
                                 compute_dtype=jnp.bfloat16)
    fwd_bf16 = jax.jit(lambda xx: surname_mlp_forward(xx, params_bf16))
    logits_bf16 = jax.block_until_ready(fwd_bf16(x))
    assert logits_bf16.shape == (batch, num_nationalities)
    assert jnp.allclose(logits_bf16, ref, atol=5e-2, rtol=5e-2)

    # Full-f32 variant: tight numerical check of the fused math (incl. folded biases).
    params_f32 = prepare_params(emb, w1, b1, w2, b2,
                                seq_len=max_surname_length,
                                compute_dtype=jnp.float32)
    logits_f32 = jax.block_until_ready(
        jax.jit(lambda xx: surname_mlp_forward(xx, params_f32))(x))
    assert jnp.allclose(logits_f32, ref, atol=2e-3, rtol=2e-3)

    # Ragged batch exercising multiple grid steps + batch padding.
    x2 = jax.random.randint(k_x2, (40, max_surname_length), 0, vocab_size,
                            dtype=jnp.int32)
    ref2 = surname_mlp_reference(x2, emb, w1, b1, w2, b2)
    logits2 = jax.block_until_ready(
        surname_mlp_forward(x2, params_f32, tile_b=16))
    assert logits2.shape == (40, num_nationalities)
    assert jnp.allclose(logits2, ref2, atol=2e-3, rtol=2e-3)

    print("KERNEL_OK")
</pallas_src>

<mosaic_0001>
module attributes {stable_mosaic.version = 11 : i64} {
  func.func @surname_mlp_kernel(%arg0: i32, %arg1: memref<8x20xi32, #tpu.memory_space<vmem>>, %arg2: memref<1x640xf32, #tpu.memory_space<vmem>>, %arg3: memref<20x640xf32, #tpu.memory_space<vmem>>, %arg4: memref<640x128xbf16, #tpu.memory_space<vmem>>, %arg5: memref<128x128xbf16, #tpu.memory_space<vmem>>, %arg6: memref<8x8xf32, #tpu.memory_space<vmem>>) attributes {dimension_semantics = [#tpu.dimension_semantics<parallel>], iteration_bounds = array<i64: 1>, scalar_prefetch = 0 : i64, scratch_operands = 0 : i64, tpu.core_type = #tpu.core_type<tc>, window_params = [{transform_indices = @transform_0, window_bounds = array<i64: 8, 20>}, {pipeline_mode = #tpu.pipeline_mode<synchronous>, transform_indices = @transform_1, window_bounds = array<i64: 1, 640>}, {pipeline_mode = #tpu.pipeline_mode<synchronous>, transform_indices = @transform_2, window_bounds = array<i64: 20, 640>}, {pipeline_mode = #tpu.pipeline_mode<synchronous>, transform_indices = @transform_3, window_bounds = array<i64: 640, 128>}, {pipeline_mode = #tpu.pipeline_mode<synchronous>, transform_indices = @transform_4, window_bounds = array<i64: 128, 128>}, {transform_indices = @transform_5, window_bounds = array<i64: 8, 8>}]} {
    %c0 = arith.constant 0 : index
    %c0_0 = arith.constant 0 : index
    %0 = vector.load %arg1[%c0, %c0_0] : memref<8x20xi32, #tpu.memory_space<vmem>>, vector<8x20xi32>
    %1 = arith.sitofp %0 : vector<8x20xi32> to vector<8x20xf32>
    %c0_1 = arith.constant 0 : index
    %c0_2 = arith.constant 0 : index
    %2 = vector.load %arg3[%c0_1, %c0_2] : memref<20x640xf32, #tpu.memory_space<vmem>>, vector<20x640xf32>
    %cst = arith.constant dense<0.000000e+00> : vector<8x640xf32>
    %3 = tpu.matmul %1, %2, %cst {dimension_numbers = #tpu.dot_dimension_numbers<[1], [0], [0], [1], [0, 0, 1, 1], [], []>} : vector<8x20xf32>, vector<20x640xf32>, vector<8x640xf32> -> vector<8x640xf32>
    %c0_3 = arith.constant 0 : index
    %c0_4 = arith.constant 0 : index
    %4 = vector.load %arg2[%c0_3, %c0_4] : memref<1x640xf32, #tpu.memory_space<vmem>>, vector<1x640xf32>
    %5 = vector.broadcast %4 : vector<1x640xf32> to vector<8x640xf32>
    %6 = arith.subf %3, %5 : vector<8x640xf32>
    %7 = math.absf %6 : vector<8x640xf32>
    %cst_5 = arith.constant 5.000000e-01 : f32
    %8 = vector.broadcast %cst_5 : f32 to vector<8x640xf32>
    %9 = arith.cmpf olt, %7, %8 : vector<8x640xf32>
    %10 = arith.extui %9 : vector<8x640xi1> to vector<8x640xi32>
    %11 = arith.sitofp %10 : vector<8x640xi32> to vector<8x640xf32>
    %12 = arith.truncf %11 : vector<8x640xf32> to vector<8x640xbf16>
    %c0_6 = arith.constant 0 : index
    %c0_7 = arith.constant 0 : index
    %13 = vector.load %arg4[%c0_6, %c0_7] : memref<640x128xbf16, #tpu.memory_space<vmem>>, vector<640x128xbf16>
    %cst_8 = arith.constant dense<0.000000e+00> : vector<8x128xf32>
    %14 = tpu.matmul %12, %13, %cst_8 {dimension_numbers = #tpu.dot_dimension_numbers<[1], [0], [0], [1], [0, 0, 1, 1], [], []>} : vector<8x640xbf16>, vector<640x128xbf16>, vector<8x128xf32> -> vector<8x128xf32>
    %cst_9 = arith.constant 0.000000e+00 : f32
    %15 = vector.broadcast %cst_9 : f32 to vector<8x128xf32>
    %16 = arith.maximumf %14, %15 : vector<8x128xf32>
    %17 = arith.truncf %16 : vector<8x128xf32> to vector<8x128xbf16>
    %c0_10 = arith.constant 0 : index
    %c0_11 = arith.constant 0 : index
    %18 = vector.load %arg5[%c0_10, %c0_11] : memref<128x128xbf16, #tpu.memory_space<vmem>>, vector<128x128xbf16>
    %cst_12 = arith.constant dense<0.000000e+00> : vector<8x128xf32>
    %19 = tpu.matmul %17, %18, %cst_12 {dimension_numbers = #tpu.dot_dimension_numbers<[1], [0], [0], [1], [0, 0, 1, 1], [], []>} : vector<8x128xbf16>, vector<128x128xbf16>, vector<8x128xf32> -> vector<8x128xf32>
    %20 = vector.extract_strided_slice %19 {offsets = [0, 0], sizes = [8, 8], strides = [1, 1]} : vector<8x128xf32> to vector<8x8xf32>
    %c0_13 = arith.constant 0 : index
    %c0_14 = arith.constant 0 : index
    %21 = vector.load %arg6[%c0_13, %c0_14] : memref<8x8xf32, #tpu.memory_space<vmem>>, vector<8x8xf32>
    tpu.vector_store %arg6[%c0_13, %c0_14], %20 {strides = array<i32>} : memref<8x8xf32, #tpu.memory_space<vmem>>, vector<8x8xf32>,
    return
  }
  func.func @transform_0(%arg0: i32) -> (i32, i32) {
    %c0_i32 = arith.constant 0 : i32
    %c0_i32_0 = arith.constant 0 : i32
    return %arg0, %c0_i32 : i32, i32
  }
  func.func @transform_1(%arg0: i32) -> (i32, i32) {
    %c0_i32 = arith.constant 0 : i32
    %c0_i32_0 = arith.constant 0 : i32
    %c0_i32_1 = arith.constant 0 : i32
    return %c0_i32, %c0_i32_0 : i32, i32
  }
  func.func @transform_2(%arg0: i32) -> (i32, i32) {
    %c0_i32 = arith.constant 0 : i32
    %c0_i32_0 = arith.constant 0 : i32
    %c0_i32_1 = arith.constant 0 : i32
    return %c0_i32, %c0_i32_0 : i32, i32
  }
  func.func @transform_3(%arg0: i32) -> (i32, i32) {
    %c0_i32 = arith.constant 0 : i32
    %c0_i32_0 = arith.constant 0 : i32
    %c0_i32_1 = arith.constant 0 : i32
    return %c0_i32, %c0_i32_0 : i32, i32
  }
  func.func @transform_4(%arg0: i32) -> (i32, i32) {
    %c0_i32 = arith.constant 0 : i32
    %c0_i32_0 = arith.constant 0 : i32
    %c0_i32_1 = arith.constant 0 : i32
    return %c0_i32, %c0_i32_0 : i32, i32
  }
  func.func @transform_5(%arg0: i32) -> (i32, i32) {
    %c0_i32 = arith.constant 0 : i32
    %c0_i32_0 = arith.constant 0 : i32
    return %arg0, %c0_i32 : i32, i32
  }
}

</mosaic_0001>

<llo_original>
// kernel: _lambda_.1
$region0: #{_lambda_.1}
  #allocation0 [shape = 'u32[]', space=smem, size = 0x4, offset = 0x4, fixed_abs, tag = 'smem constant byte address 0x4 - core index']
  #allocation1 [shape = 'u32[72,128]{1,0:T(1,128)}', space=vmem, size = 0x9000, scoped, tag = 'internal scratch']
  %s0 = inlined_call_operand.hbm [shape: s32[8,20], index: 0, kind: input, shape index: {}]
  %s1 = inlined_call_operand.hbm [shape: f32[1,640], index: 1, kind: input, shape index: {}]
  %s2 = inlined_call_operand.hbm [shape: f32[20,640], index: 2, kind: input, shape index: {}]
  %s3 = inlined_call_operand.hbm [shape: bf16[640,128], index: 3, kind: input, shape index: {}]
  %s4 = inlined_call_operand.hbm [shape: bf16[128,128], index: 4, kind: input, shape index: {}]
  %s5 = inlined_call_operand.hbm [shape: f32[8,8], index: 5, kind: output, shape index: {}]
  %s6 = sld [smem:[#allocation0]]
  $region50: #{_lambda_.1} parent=0
    _
  %s8 = ssub.s32 1, %s6
  %s9 = scalar_select 0, %s8, %s6
  $region1: #{_lambda_.1} parent=0
    #allocation2 [shape = 'u8[4096]{0}', space=vmem, size = 0x1000, scoped, tag = 'input window, operand 0, single buffered']
    #allocation3 [shape = 's32[1]{0}', space=sflag, size = 0x4, scoped, tag = 'scoped memory for _lambda_.1']
    #allocation4 [shape = 's32[1]{0}', space=sflag, size = 0x4, scoped, tag = 'scoped memory for _lambda_.1']
    #allocation5 [shape = 'u8[2560]{0}', space=vmem, size = 0xc00, scoped, tag = 'input window, operand 1, single buffered']
    #allocation6 [shape = 's32[1]{0}', space=sflag, size = 0x4, scoped, tag = 'scoped memory for _lambda_.1']
    #allocation7 [shape = 'u8[61440]{0}', space=vmem, size = 0xf000, scoped, tag = 'input window, operand 2, single buffered']
    #allocation8 [shape = 'u8[163840]{0}', space=vmem, size = 0x28000, scoped, tag = 'input window, operand 3, single buffered']
    #allocation9 [shape = 's32[1]{0}', space=sflag, size = 0x4, scoped, tag = 'scoped memory for _lambda_.1']
    #allocation10 [shape = 'u8[32768]{0}', space=vmem, size = 0x8000, scoped, tag = 'input window, operand 4, single buffered']
    #allocation11 [shape = 'u8[4096]{0}', space=vmem, size = 0x1000, scoped, tag = 'output window, operand 0, single buffered']
    %10 = vsyncpa [#allocation3], 0
    %11 = vsyncpa [#allocation6], 0
    %12 = vsyncpa [#allocation9], 0
    %13 = vsyncpa [#allocation4], 0
    // Predicated region
    $region2: #{_lambda_.1} parent=1 // pred_check
      _
    $region3: #{_lambda_.1} parent=1 // pred_check_branch
      %15 = sbr.rel (0) target = $region5
    $region4: #{_lambda_.1} parent=1 // pred_region
      %17 = vsyncadd [#allocation3], 0
      %s19 = sshll.u32 %s0, 4
      %s20 = int_to_ptr.hbm [resolvable:$true] %s19
      %s21 = sshll.u32 [#allocation2], 4
      %s22 = int_to_ptr.vmem [resolvable:$true] %s21
      %24 = dma.hbm_to_vmem [thread:$0]  %s20, 128, %s22, [#allocation3]
    $region5: #{_lambda_.1} parent=1 // pred_fallthru
      _
    // Predicated region
    $region6: #{_lambda_.1} parent=1 // pred_check
      _
    $region7: #{_lambda_.1} parent=1 // pred_check_branch
      %26 = sbr.rel (0) target = $region9
    $region8: #{_lambda_.1} parent=1 // pred_region
      %28 = vsyncadd [#allocation6], 0
      %s30 = sshll.u32 %s1, 4
      %s31 = int_to_ptr.hbm [resolvable:$true] %s30
      %s32 = sshll.u32 [#allocation5], 4
      %s33 = int_to_ptr.vmem [resolvable:$true] %s32
      %35 = dma.hbm_to_vmem [thread:$0]  %s31, 80, %s33, [#allocation6]
    $region9: #{_lambda_.1} parent=1 // pred_fallthru
      _
    // Predicated region
    $region10: #{_lambda_.1} parent=1 // pred_check
      _
    $region11: #{_lambda_.1} parent=1 // pred_check_branch
      %37 = sbr.rel (0) target = $region13
    $region12: #{_lambda_.1} parent=1 // pred_region
      %39 = vsyncadd [#allocation6], 0
      %s40 = sshll.u32 %s2, 4
      %s41 = int_to_ptr.hbm [resolvable:$true] %s40
      %s42 = sshll.u32 [#allocation7], 4
      %s43 = int_to_ptr.vmem [resolvable:$true] %s42
      %48 = dma.hbm_to_vmem [thread:$0]  %s41, 1920, %s43, [#allocation6], 640, 640, 40
    $region13: #{_lambda_.1} parent=1 // pred_fallthru
      _
    // Predicated region
    $region14: #{_lambda_.1} parent=1 // pred_check
      _
    $region15: #{_lambda_.1} parent=1 // pred_check_branch
      %50 = sbr.rel (0) target = $region17
    $region16: #{_lambda_.1} parent=1 // pred_region
      %52 = vsyncadd [#allocation9], 0
      %s53 = sshll.u32 %s3, 4
      %s54 = int_to_ptr.hbm [resolvable:$true] %s53
      %s55 = sshll.u32 [#allocation8], 4
      %s56 = int_to_ptr.vmem [resolvable:$true] %s55
      %61 = dma.hbm_to_vmem [thread:$0]  %s54, 5120, %s56, [#allocation9], 64, 64, 4
    $region17: #{_lambda_.1} parent=1 // pred_fallthru
      _
    // Predicated region
    $region18: #{_lambda_.1} parent=1 // pred_check
      _
    $region19: #{_lambda_.1} parent=1 // pred_check_branch
      %63 = sbr.rel (0) target = $region21
    $region20: #{_lambda_.1} parent=1 // pred_region
      %65 = vsyncadd [#allocation9], 0
      %s66 = sshll.u32 %s4, 4
      %s67 = int_to_ptr.hbm [resolvable:$true] %s66
      %s68 = sshll.u32 [#allocation10], 4
      %s69 = int_to_ptr.vmem [resolvable:$true] %s68
      %74 = dma.hbm_to_vmem [thread:$0]  %s67, 1024, %s69, [#allocation9], 64, 64, 4
    $region21: #{_lambda_.1} parent=1 // pred_fallthru
      _
    // Predicated region
    $region22: #{_lambda_.1} parent=1 // pred_check
      _
    $region23: #{_lambda_.1} parent=1 // pred_check_branch
      %76 = sbr.rel (0) target = $region25
    $region24: #{_lambda_.1} parent=1 // pred_region
      %78 = dma.done [#allocation3], 128
    $region25: #{_lambda_.1} parent=1 // pred_fallthru
      _
    // Predicated region
    $region26: #{_lambda_.1} parent=1 // pred_check
      _
    $region27: #{_lambda_.1} parent=1 // pred_check_branch
      %80 = sbr.rel (0) target = $region29
    $region28: #{_lambda_.1} parent=1 // pred_region
      %82 = dma.done [#allocation6], 80
    $region29: #{_lambda_.1} parent=1 // pred_fallthru
      _
    // Predicated region
    $region30: #{_lambda_.1} parent=1 // pred_check
      _
    $region31: #{_lambda_.1} parent=1 // pred_check_branch
      %84 = sbr.rel (0) target = $region33
    $region32: #{_lambda_.1} parent=1 // pred_region
      %86 = dma.done [#allocation6], 1920
    $region33: #{_lambda_.1} parent=1 // pred_fallthru
      _
    // Predicated region
    $region34: #{_lambda_.1} parent=1 // pred_check
      _
    $region35: #{_lambda_.1} parent=1 // pred_check_branch
      %88 = sbr.rel (0) target = $region37
    $region36: #{_lambda_.1} parent=1 // pred_region
      %90 = dma.done [#allocation9], 5120
    $region37: #{_lambda_.1} parent=1 // pred_fallthru
      _
    // Predicated region
    $region38: #{_lambda_.1} parent=1 // pred_check
      _
    $region39: #{_lambda_.1} parent=1 // pred_check_branch
      %92 = sbr.rel (0) target = $region41
    $region40: #{_lambda_.1} parent=1 // pred_region
      %94 = dma.done [#allocation9], 1024
    $region41: #{_lambda_.1} parent=1 // pred_fallthru
      _
    %v95 = vld [vmem:[#allocation2] sm:$0xff]
    %v96 = vcvt.s32.f32 %v95
    %v97 = vld [vmem:[#allocation7] sm:$0xff]
    %v98 = vld [vmem:[#allocation7 + $0x8] sm:$0xff]
    %v99 = vld [vmem:[#allocation7 + $0x10] sm:$0xff]
    %v100 = vld [vmem:[#allocation7 + $0x18] sm:$0xff]
    %v101 = vld [vmem:[#allocation7 + $0x20] sm:$0xff]
    %v102 = vld [vmem:[#allocation7 + $0x28] sm:$0xff]
    %v103 = vld [vmem:[#allocation7 + $0x30] sm:$0xff]
    %v104 = vld [vmem:[#allocation7 + $0x38] sm:$0xff]
    %v105 = vld [vmem:[#allocation7 + $0x40] sm:$0xff]
    %v106 = vld [vmem:[#allocation7 + $0x48] sm:$0xff]
    %v107 = vld [vmem:[#allocation7 + $0x50] sm:$0xf]
    %v108 = vld [vmem:[#allocation7 + $0x58] sm:$0xf]
    %v109 = vld [vmem:[#allocation7 + $0x60] sm:$0xf]
    %v110 = vld [vmem:[#allocation7 + $0x68] sm:$0xf]
    %v111 = vld [vmem:[#allocation7 + $0x70] sm:$0xf]
    %vm112 = vcmask 162816
    %v114 = vsel %vm112, %v96, 0
    %vm116 = vcmask 1043456
    %v118 = vsel %vm116, %v107, 0
    %v121 = vsel %vm116, %v108, 0
    %v124 = vsel %vm116, %v109, 0
    %v127 = vsel %vm116, %v110, 0
    %v130 = vsel %vm116, %v111, 0
    %132 = vmatpush.msra.mxu0 0.0
    %133 = vmatpush.msra.mxu0 0.0
    %134 = vmatpush.msra.mxu0 0.0
    %135 = vmatpush.msra.mxu0 0.0
    %136 = vmatpush.msra.mxu0 0.0
    %137 = vmatpush.msra.mxu0 0.0
    %138 = vmatpush.msra.mxu0 0.0
    %139 = vmatpush.msra.mxu0 0.0
    %140 = vmatpush.msra.mxu0 0.0
    %141 = vmatpush.msra.mxu0 0.0
    %142 = vmatpush.msra.mxu0 0.0
    %143 = vmatpush.msra.mxu0 0.0
    %144 = vmatpush.msra.mxu0 0.0
    %145 = vmatpush.msra.mxu0 %v118
    %146 = vmatpush.msra.mxu0 %v102
    %147 = vmatpush.msra.mxu0 %v97
    %148 = vmatmul.f32.gmra.mxu0 %v114
    %v149 = vpop.f32.mrf.mxu0
    %v150 = vadd.f32 0.0, %v149
    %151 = vdwg.mxu0
    %152 = vmatpush.msra.mxu0 0.0
    %153 = vmatpush.msra.mxu0 0.0
    %154 = vmatpush.msra.mxu0 0.0
    %155 = vmatpush.msra.mxu0 0.0
    %156 = vmatpush.msra.mxu0 0.0
    %157 = vmatpush.msra.mxu0 0.0
    %158 = vmatpush.msra.mxu0 0.0
    %159 = vmatpush.msra.mxu0 0.0
    %160 = vmatpush.msra.mxu0 0.0
    %161 = vmatpush.msra.mxu0 0.0
    %162 = vmatpush.msra.mxu0 0.0
    %163 = vmatpush.msra.mxu0 0.0
    %164 = vmatpush.msra.mxu0 0.0
    %165 = vmatpush.msra.mxu0 %v121
    %166 = vmatpush.msra.mxu0 %v103
    %167 = vmatpush.msra.mxu0 %v98
    %168 = vmatmul.f32.gmra.mxu0 %v114
    %v169 = vpop.f32.mrf.mxu0
    %v170 = vadd.f32 0.0, %v169
    %171 = vdwg.mxu0
    %172 = vmatpush.msra.mxu0 0.0
    %173 = vmatpush.msra.mxu0 0.0
    %174 = vmatpush.msra.mxu0 0.0
    %175 = vmatpush.msra.mxu0 0.0
    %176 = vmatpush.msra.mxu0 0.0
    %177 = vmatpush.msra.mxu0 0.0
    %178 = vmatpush.msra.mxu0 0.0
    %179 = vmatpush.msra.mxu0 0.0
    %180 = vmatpush.msra.mxu0 0.0
    %181 = vmatpush.msra.mxu0 0.0
    %182 = vmatpush.msra.mxu0 0.0
    %183 = vmatpush.msra.mxu0 0.0
    %184 = vmatpush.msra.mxu0 0.0
    %185 = vmatpush.msra.mxu0 %v124
    %186 = vmatpush.msra.mxu0 %v104
    %187 = vmatpush.msra.mxu0 %v99
    %188 = vmatmul.f32.gmra.mxu0 %v114
    %v189 = vpop.f32.mrf.mxu0
    %v190 = vadd.f32 0.0, %v189
    %191 = vdwg.mxu0
    %192 = vmatpush.msra.mxu0 0.0
    %193 = vmatpush.msra.mxu0 0.0
    %194 = vmatpush.msra.mxu0 0.0
    %195 = vmatpush.msra.mxu0 0.0
    %196 = vmatpush.msra.mxu0 0.0
    %197 = vmatpush.msra.mxu0 0.0
    %198 = vmatpush.msra.mxu0 0.0
    %199 = vmatpush.msra.mxu0 0.0
    %200 = vmatpush.msra.mxu0 0.0
    %201 = vmatpush.msra.mxu0 0.0
    %202 = vmatpush.msra.mxu0 0.0
    %203 = vmatpush.msra.mxu0 0.0
    %204 = vmatpush.msra.mxu0 0.0
    %205 = vmatpush.msra.mxu0 %v127
    %206 = vmatpush.msra.mxu0 %v105
    %207 = vmatpush.msra.mxu0 %v100
    %208 = vmatmul.f32.gmra.mxu0 %v114
    %v209 = vpop.f32.mrf.mxu0
    %v210 = vadd.f32 0.0, %v209
    %211 = vdwg.mxu0
    %212 = vmatpush.msra.mxu0 0.0
    %213 = vmatpush.msra.mxu0 0.0
    %214 = vmatpush.msra.mxu0 0.0
    %215 = vmatpush.msra.mxu0 0.0
    %216 = vmatpush.msra.mxu0 0.0
    %217 = vmatpush.msra.mxu0 0.0
    %218 = vmatpush.msra.mxu0 0.0
    %219 = vmatpush.msra.mxu0 0.0
    %220 = vmatpush.msra.mxu0 0.0
    %221 = vmatpush.msra.mxu0 0.0
    %222 = vmatpush.msra.mxu0 0.0
    %223 = vmatpush.msra.mxu0 0.0
    %224 = vmatpush.msra.mxu0 0.0
    %225 = vmatpush.msra.mxu0 %v130
    %226 = vmatpush.msra.mxu0 %v106
    %227 = vmatpush.msra.mxu0 %v101
    %228 = vmatmul.f32.gmra.mxu0 %v114
    %v229 = vpop.f32.mrf.mxu0
    %v230 = vadd.f32 0.0, %v229
    %231 = vdwg.mxu0
    %v232 = vld [vmem:[#allocation5] sm:$0x1f]
    %v234 = vperm.slane %v232, 0
    %v235 = vperm.slane %v232, 1
    %v236 = vperm.slane %v232, 2
    %v237 = vperm.slane %v232, 3
    %v238 = vperm.slane %v232, 4
    %v244 = vsub.f32 %v150, %v234
    %v245 = vsub.f32 %v170, %v235
    %v246 = vsub.f32 %v190, %v236
    %v247 = vsub.f32 %v210, %v237
    %v248 = vsub.f32 %v230, %v238
    %v249 = vand.u32 2147483647, %v244
    %v250 = vand.u32 2147483647, %v245
    %v251 = vand.u32 2147483647, %v246
    %v252 = vand.u32 2147483647, %v247
    %v253 = vand.u32 2147483647, %v248
    %vm254 = vcmp.lt.f32.partialorder %v249, 0.5
    %vm255 = vcmp.lt.f32.partialorder %v250, 0.5
    %vm256 = vcmp.lt.f32.partialorder %v251, 0.5
    %vm257 = vcmp.lt.f32.partialorder %v252, 0.5
    %vm258 = vcmp.lt.f32.partialorder %v253, 0.5
    %v259 = vsel %vm254, 1, 0
    %v260 = vsel %vm255, 1, 0
    %v261 = vsel %vm256, 1, 0
    %v262 = vsel %vm257, 1, 0
    %v263 = vsel %vm258, 1, 0
    %v264 = vcvt.s32.f32 %v259
    %v265 = vcvt.s32.f32 %v260
    %v266 = vcvt.s32.f32 %v261
    %v267 = vcvt.s32.f32 %v262
    %v268 = vcvt.s32.f32 %v263
    %v269 = vpack.c.bf16 %v264, %v264
    %v270 = vpack.c.bf16 %v265, %v265
    %v271 = vpack.c.bf16 %v266, %v266
    %v272 = vpack.c.bf16 %v267, %v267
    %v273 = vpack.c.bf16 %v268, %v268
    %v274 = vld [vmem:[#allocation8] sm:$0xf]
    %v275 = vld [vmem:[#allocation8 + $0x4] sm:$0xf]
    %v276 = vld [vmem:[#allocation8 + $0x8] sm:$0xf]
    %v277 = vld [vmem:[#allocation8 + $0xc] sm:$0xf]
    %v278 = vld [vmem:[#allocation8 + $0x10] sm:$0xf]
    %v279 = vld [vmem:[#allocation8 + $0x14] sm:$0xf]
    %v280 = vld [vmem:[#allocation8 + $0x18] sm:$0xf]
    %v281 = vld [vmem:[#allocation8 + $0x1c] sm:$0xf]
    %v282 = vld [vmem:[#allocation8 + $0x20] sm:$0xf]
    %v283 = vld [vmem:[#allocation8 + $0x24] sm:$0xf]
    %v284 = vld [vmem:[#allocation8 + $0x28] sm:$0xf]
    %v285 = vld [vmem:[#allocation8 + $0x2c] sm:$0xf]
    %v286 = vld [vmem:[#allocation8 + $0x30] sm:$0xf]
    %v287 = vld [vmem:[#allocation8 + $0x34] sm:$0xf]
    %v288 = vld [vmem:[#allocation8 + $0x38] sm:$0xf]
    %v289 = vld [vmem:[#allocation8 + $0x3c] sm:$0xf]
    %v290 = vld [vmem:[#allocation8 + $0x40] sm:$0xf]
    %v291 = vld [vmem:[#allocation8 + $0x44] sm:$0xf]
    %v292 = vld [vmem:[#allocation8 + $0x48] sm:$0xf]
    %v293 = vld [vmem:[#allocation8 + $0x4c] sm:$0xf]
    %v294 = vld [vmem:[#allocation8 + $0x50] sm:$0xf]
    %v295 = vld [vmem:[#allocation8 + $0x54] sm:$0xf]
    %v296 = vld [vmem:[#allocation8 + $0x58] sm:$0xf]
    %v297 = vld [vmem:[#allocation8 + $0x5c] sm:$0xf]
    %v298 = vld [vmem:[#allocation8 + $0x60] sm:$0xf]
    %v299 = vld [vmem:[#allocation8 + $0x64] sm:$0xf]
    %v300 = vld [vmem:[#allocation8 + $0x68] sm:$0xf]
    %v301 = vld [vmem:[#allocation8 + $0x6c] sm:$0xf]
    %v302 = vld [vmem:[#allocation8 + $0x70] sm:$0xf]
    %v303 = vld [vmem:[#allocation8 + $0x74] sm:$0xf]
    %v304 = vld [vmem:[#allocation8 + $0x78] sm:$0xf]
    %v305 = vld [vmem:[#allocation8 + $0x7c] sm:$0xf]
    %v306 = vld [vmem:[#allocation8 + $0x80] sm:$0xf]
    %v307 = vld [vmem:[#allocation8 + $0x84] sm:$0xf]
    %v308 = vld [vmem:[#allocation8 + $0x88] sm:$0xf]
    %v309 = vld [vmem:[#allocation8 + $0x8c] sm:$0xf]
    %v310 = vld [vmem:[#allocation8 + $0x90] sm:$0xf]
    %v311 = vld [vmem:[#allocation8 + $0x94] sm:$0xf]
    %v312 = vld [vmem:[#allocation8 + $0x98] sm:$0xf]
    %v313 = vld [vmem:[#allocation8 + $0x9c] sm:$0xf]
    %v314 = vld [vmem:[#allocation8 + $0xa0] sm:$0xf]
    %v315 = vld [vmem:[#allocation8 + $0xa4] sm:$0xf]
    %v316 = vld [vmem:[#allocation8 + $0xa8] sm:$0xf]
    %v317 = vld [vmem:[#allocation8 + $0xac] sm:$0xf]
    %v318 = vld [vmem:[#allocation8 + $0xb0] sm:$0xf]
    %v319 = vld [vmem:[#allocation8 + $0xb4] sm:$0xf]
    %v320 = vld [vmem:[#allocation8 + $0xb8] sm:$0xf]
    %v321 = vld [vmem:[#allocation8 + $0xbc] sm:$0xf]
    %v322 = vld [vmem:[#allocation8 + $0xc0] sm:$0xf]
    %v323 = vld [vmem:[#allocation8 + $0xc4] sm:$0xf]
    %v324 = vld [vmem:[#allocation8 + $0xc8] sm:$0xf]
    %v325 = vld [vmem:[#allocation8 + $0xcc] sm:$0xf]
    %v326 = vld [vmem:[#allocation8 + $0xd0] sm:$0xf]
    %v327 = vld [vmem:[#allocation8 + $0xd4] sm:$0xf]
    %v328 = vld [vmem:[#allocation8 + $0xd8] sm:$0xf]
    %v329 = vld [vmem:[#allocation8 + $0xdc] sm:$0xf]
    %v330 = vld [vmem:[#allocation8 + $0xe0] sm:$0xf]
    %v331 = vld [vmem:[#allocation8 + $0xe4] sm:$0xf]
    %v332 = vld [vmem:[#allocation8 + $0xe8] sm:$0xf]
    %v333 = vld [vmem:[#allocation8 + $0xec] sm:$0xf]
    %v334 = vld [vmem:[#allocation8 + $0xf0] sm:$0xf]
    %v335 = vld [vmem:[#allocation8 + $0xf4] sm:$0xf]
    %v336 = vld [vmem:[#allocation8 + $0xf8] sm:$0xf]
    %v337 = vld [vmem:[#allocation8 + $0xfc] sm:$0xf]
    %v338 = vld [vmem:[#allocation8 + $0x100] sm:$0xf]
    %v339 = vld [vmem:[#allocation8 + $0x104] sm:$0xf]
    %v340 = vld [vmem:[#allocation8 + $0x108] sm:$0xf]
    %v341 = vld [vmem:[#allocation8 + $0x10c] sm:$0xf]
    %v342 = vld [vmem:[#allocation8 + $0x110] sm:$0xf]
    %v343 = vld [vmem:[#allocation8 + $0x114] sm:$0xf]
    %v344 = vld [vmem:[#allocation8 + $0x118] sm:$0xf]
    %v345 = vld [vmem:[#allocation8 + $0x11c] sm:$0xf]
    %v346 = vld [vmem:[#allocation8 + $0x120] sm:$0xf]
    %v347 = vld [vmem:[#allocation8 + $0x124] sm:$0xf]
    %v348 = vld [vmem:[#allocation8 + $0x128] sm:$0xf]
    %v349 = vld [vmem:[#allocation8 + $0x12c] sm:$0xf]
    %v350 = vld [vmem:[#allocation8 + $0x130] sm:$0xf]
    %v351 = vld [vmem:[#allocation8 + $0x134] sm:$0xf]
    %v352 = vld [vmem:[#allocation8 + $0x138] sm:$0xf]
    %v353 = vld [vmem:[#allocation8 + $0x13c] sm:$0xf]
    %v434 = vunpack.c.l.b16 %v274
    %v435 = vunpack.c.l.b16 %v275
    %v436 = vunpack.c.l.b16 %v276
    %v437 = vunpack.c.l.b16 %v277
    %v438 = vunpack.c.l.b16 %v278
    %v439 = vunpack.c.l.b16 %v279
    %v440 = vunpack.c.l.b16 %v280
    %v441 = vunpack.c.l.b16 %v281
    %v442 = vunpack.c.l.b16 %v282
    %v443 = vunpack.c.l.b16 %v283
    %v444 = vunpack.c.l.b16 %v284
    %v445 = vunpack.c.l.b16 %v285
    %v446 = vunpack.c.l.b16 %v286
    %v447 = vunpack.c.l.b16 %v287
    %v448 = vunpack.c.l.b16 %v288
    %v449 = vunpack.c.l.b16 %v289
    %v450 = vunpack.c.l.b16 %v290
    %v451 = vunpack.c.l.b16 %v291
    %v452 = vunpack.c.l.b16 %v292
    %v453 = vunpack.c.l.b16 %v293
    %v454 = vunpack.c.l.b16 %v294
    %v455 = vunpack.c.l.b16 %v295
    %v456 = vunpack.c.l.b16 %v296
    %v457 = vunpack.c.l.b16 %v297
    %v458 = vunpack.c.l.b16 %v298
    %v459 = vunpack.c.l.b16 %v299
    %v460 = vunpack.c.l.b16 %v300
    %v461 = vunpack.c.l.b16 %v301
    %v462 = vunpack.c.l.b16 %v302
    %v463 = vunpack.c.l.b16 %v303
    %v464 = vunpack.c.l.b16 %v304
    %v465 = vunpack.c.l.b16 %v305
    %v466 = vunpack.c.l.b16 %v306
    %v467 = vunpack.c.l.b16 %v307
    %v468 = vunpack.c.l.b16 %v308
    %v469 = vunpack.c.l.b16 %v309
    %v470 = vunpack.c.l.b16 %v310
    %v471 = vunpack.c.l.b16 %v311
    %v472 = vunpack.c.l.b16 %v312
    %v473 = vunpack.c.l.b16 %v313
    %v474 = vunpack.c.l.b16 %v314
    %v475 = vunpack.c.l.b16 %v315
    %v476 = vunpack.c.l.b16 %v316
    %v477 = vunpack.c.l.b16 %v317
    %v478 = vunpack.c.l.b16 %v318
    %v479 = vunpack.c.l.b16 %v319
    %v480 = vunpack.c.l.b16 %v320
    %v481 = vunpack.c.l.b16 %v321
    %v482 = vunpack.c.l.b16 %v322
    %v483 = vunpack.c.l.b16 %v323
    %v484 = vunpack.c.l.b16 %v324
    %v485 = vunpack.c.l.b16 %v325
    %v486 = vunpack.c.l.b16 %v326
    %v487 = vunpack.c.l.b16 %v327
    %v488 = vunpack.c.l.b16 %v328
    %v489 = vunpack.c.l.b16 %v329
    %v490 = vunpack.c.l.b16 %v330
    %v491 = vunpack.c.l.b16 %v331
    %v492 = vunpack.c.l.b16 %v332
    %v493 = vunpack.c.l.b16 %v333
    %v494 = vunpack.c.l.b16 %v334
    %v495 = vunpack.c.l.b16 %v335
    %v496 = vunpack.c.l.b16 %v336
    %v497 = vunpack.c.l.b16 %v337
    %v498 = vunpack.c.l.b16 %v338
    %v499 = vunpack.c.l.b16 %v339
    %v500 = vunpack.c.l.b16 %v340
    %v501 = vunpack.c.l.b16 %v341
    %v502 = vunpack.c.l.b16 %v342
    %v503 = vunpack.c.l.b16 %v343
    %v504 = vunpack.c.l.b16 %v344
    %v505 = vunpack.c.l.b16 %v345
    %v506 = vunpack.c.l.b16 %v346
    %v507 = vunpack.c.l.b16 %v347
    %v508 = vunpack.c.l.b16 %v348
    %v509 = vunpack.c.l.b16 %v349
    %v510 = vunpack.c.l.b16 %v350
    %v511 = vunpack.c.l.b16 %v351
    %v512 = vunpack.c.l.b16 %v352
    %v513 = vunpack.c.l.b16 %v353
    %v514 = vpack.c.b16 %v435, %v434
    %v515 = vpack.c.b16 %v437, %v436
    %v516 = vpack.c.b16 %v439, %v438
    %v517 = vpack.c.b16 %v441, %v440
    %v518 = vpack.c.b16 %v443, %v442
    %v519 = vpack.c.b16 %v445, %v444
    %v520 = vpack.c.b16 %v447, %v446
    %v521 = vpack.c.b16 %v449, %v448
    %v522 = vpack.c.b16 %v451, %v450
    %v523 = vpack.c.b16 %v453, %v452
    %v524 = vpack.c.b16 %v455, %v454
    %v525 = vpack.c.b16 %v457, %v456
    %v526 = vpack.c.b16 %v459, %v458
    %v527 = vpack.c.b16 %v461, %v460
    %v528 = vpack.c.b16 %v463, %v462
    %v529 = vpack.c.b16 %v465, %v464
    %v530 = vpack.c.b16 %v467, %v466
    %v531 = vpack.c.b16 %v469, %v468
    %v532 = vpack.c.b16 %v471, %v470
    %v533 = vpack.c.b16 %v473, %v472
    %v534 = vpack.c.b16 %v475, %v474
    %v535 = vpack.c.b16 %v477, %v476
    %v536 = vpack.c.b16 %v479, %v478
    %v537 = vpack.c.b16 %v481, %v480
    %v538 = vpack.c.b16 %v483, %v482
    %v539 = vpack.c.b16 %v485, %v484
    %v540 = vpack.c.b16 %v487, %v486
    %v541 = vpack.c.b16 %v489, %v488
    %v542 = vpack.c.b16 %v491, %v490
    %v543 = vpack.c.b16 %v493, %v492
    %v544 = vpack.c.b16 %v495, %v494
    %v545 = vpack.c.b16 %v497, %v496
    %v546 = vpack.c.b16 %v499, %v498
    %v547 = vpack.c.b16 %v501, %v500
    %v548 = vpack.c.b16 %v503, %v502
    %v549 = vpack.c.b16 %v505, %v504
    %v550 = vpack.c.b16 %v507, %v506
    %v551 = vpack.c.b16 %v509, %v508
    %v552 = vpack.c.b16 %v511, %v510
    %v553 = vpack.c.b16 %v513, %v512
    %594 = vmatpush.bf16.msra.mxu0 %v521
    %595 = vmatpush.bf16.msra.mxu0 %v520
    %596 = vmatpush.bf16.msra.mxu0 %v519
    %597 = vmatpush.bf16.msra.mxu0 %v518
    %598 = vmatpush.bf16.msra.mxu0 %v517
    %599 = vmatpush.bf16.msra.mxu0 %v516
    %600 = vmatpush.bf16.msra.mxu0 %v515
    %601 = vmatpush.bf16.msra.mxu0 %v514
    %602 = vmatmul.bf16.gmra.mxu0 %v269
    %v603 = vpop.f32.mrf.mxu0
    %v604 = vadd.f32 0.0, %v603
    %v605 = vpop.f32.mrf.mxu0
    %606 = vdwg.mxu0
    %607 = vmatpush.bf16.msra.mxu0 %v529
    %608 = vmatpush.bf16.msra.mxu0 %v528
    %609 = vmatpush.bf16.msra.mxu0 %v527
    %610 = vmatpush.bf16.msra.mxu0 %v526
    %611 = vmatpush.bf16.msra.mxu0 %v525
    %612 = vmatpush.bf16.msra.mxu0 %v524
    %613 = vmatpush.bf16.msra.mxu0 %v523
    %614 = vmatpush.bf16.msra.mxu0 %v522
    %615 = vmatmul.bf16.gmra.mxu0 %v270
    %v616 = vpop.f32.mrf.mxu0
    %v617 = vadd.f32 %v604, %v616
    %v618 = vpop.f32.mrf.mxu0
    %619 = vdwg.mxu0
    %620 = vmatpush.bf16.msra.mxu0 %v537
    %621 = vmatpush.bf16.msra.mxu0 %v536
    %622 = vmatpush.bf16.msra.mxu0 %v535
    %623 = vmatpush.bf16.msra.mxu0 %v534
    %624 = vmatpush.bf16.msra.mxu0 %v533
    %625 = vmatpush.bf16.msra.mxu0 %v532
    %626 = vmatpush.bf16.msra.mxu0 %v531
    %627 = vmatpush.bf16.msra.mxu0 %v530
    %628 = vmatmul.bf16.gmra.mxu0 %v271
    %v629 = vpop.f32.mrf.mxu0
    %v630 = vadd.f32 %v617, %v629
    %v631 = vpop.f32.mrf.mxu0
    %632 = vdwg.mxu0
    %633 = vmatpush.bf16.msra.mxu0 %v545
    %634 = vmatpush.bf16.msra.mxu0 %v544
    %635 = vmatpush.bf16.msra.mxu0 %v543
    %636 = vmatpush.bf16.msra.mxu0 %v542
    %637 = vmatpush.bf16.msra.mxu0 %v541
    %638 = vmatpush.bf16.msra.mxu0 %v540
    %639 = vmatpush.bf16.msra.mxu0 %v539
    %640 = vmatpush.bf16.msra.mxu0 %v538
    %641 = vmatmul.bf16.gmra.mxu0 %v272
    %v642 = vpop.f32.mrf.mxu0
    %v643 = vadd.f32 %v630, %v642
    %v644 = vpop.f32.mrf.mxu0
    %645 = vdwg.mxu0
    %646 = vmatpush.bf16.msra.mxu0 %v553
    %647 = vmatpush.bf16.msra.mxu0 %v552
    %648 = vmatpush.bf16.msra.mxu0 %v551
    %649 = vmatpush.bf16.msra.mxu0 %v550
    %650 = vmatpush.bf16.msra.mxu0 %v549
    %651 = vmatpush.bf16.msra.mxu0 %v548
    %652 = vmatpush.bf16.msra.mxu0 %v547
    %653 = vmatpush.bf16.msra.mxu0 %v546
    %654 = vmatmul.bf16.gmra.mxu0 %v273
    %v655 = vpop.f32.mrf.mxu0
    %v656 = vadd.f32 %v643, %v655
    %v657 = vpop.f32.mrf.mxu0
    %658 = vdwg.mxu0
    %v659 = vmax.f32 %v656, 0.0
    %v660 = vpack.c.bf16 %v659, %v659
    %v661 = vld [vmem:[#allocation10] sm:$0xf]
    %v662 = vld [vmem:[#allocation10 + $0x4] sm:$0xf]
    %v663 = vld [vmem:[#allocation10 + $0x8] sm:$0xf]
    %v664 = vld [vmem:[#allocation10 + $0xc] sm:$0xf]
    %v665 = vld [vmem:[#allocation10 + $0x10] sm:$0xf]
    %v666 = vld [vmem:[#allocation10 + $0x14] sm:$0xf]
    %v667 = vld [vmem:[#allocation10 + $0x18] sm:$0xf]
    %v668 = vld [vmem:[#allocation10 + $0x1c] sm:$0xf]
    %v669 = vld [vmem:[#allocation10 + $0x20] sm:$0xf]
    %v670 = vld [vmem:[#allocation10 + $0x24] sm:$0xf]
    %v671 = vld [vmem:[#allocation10 + $0x28] sm:$0xf]
    %v672 = vld [vmem:[#allocation10 + $0x2c] sm:$0xf]
    %v673 = vld [vmem:[#allocation10 + $0x30] sm:$0xf]
    %v674 = vld [vmem:[#allocation10 + $0x34] sm:$0xf]
    %v675 = vld [vmem:[#allocation10 + $0x38] sm:$0xf]
    %v676 = vld [vmem:[#allocation10 + $0x3c] sm:$0xf]
    %v693 = vunpack.c.l.b16 %v661
    %v694 = vunpack.c.l.b16 %v662
    %v695 = vunpack.c.l.b16 %v663
    %v696 = vunpack.c.l.b16 %v664
    %v697 = vunpack.c.l.b16 %v665
    %v698 = vunpack.c.l.b16 %v666
    %v699 = vunpack.c.l.b16 %v667
    %v700 = vunpack.c.l.b16 %v668
    %v701 = vunpack.c.l.b16 %v669
    %v702 = vunpack.c.l.b16 %v670
    %v703 = vunpack.c.l.b16 %v671
    %v704 = vunpack.c.l.b16 %v672
    %v705 = vunpack.c.l.b16 %v673
    %v706 = vunpack.c.l.b16 %v674
    %v707 = vunpack.c.l.b16 %v675
    %v708 = vunpack.c.l.b16 %v676
    %v709 = vpack.c.b16 %v694, %v693
    %v710 = vpack.c.b16 %v696, %v695
    %v711 = vpack.c.b16 %v698, %v697
    %v712 = vpack.c.b16 %v700, %v699
    %v713 = vpack.c.b16 %v702, %v701
    %v714 = vpack.c.b16 %v704, %v703
    %v715 = vpack.c.b16 %v706, %v705
    %v716 = vpack.c.b16 %v708, %v707
    %725 = vmatpush.bf16.msra.mxu0 %v716
    %726 = vmatpush.bf16.msra.mxu0 %v715
    %727 = vmatpush.bf16.msra.mxu0 %v714
    %728 = vmatpush.bf16.msra.mxu0 %v713
    %729 = vmatpush.bf16.msra.mxu0 %v712
    %730 = vmatpush.bf16.msra.mxu0 %v711
    %731 = vmatpush.bf16.msra.mxu0 %v710
    %732 = vmatpush.bf16.msra.mxu0 %v709
    %733 = vmatmul.bf16.gmra.mxu0 %v660
    %v734 = vpop.f32.mrf.mxu0
    %v735 = vadd.f32 0.0, %v734
    %v736 = vpop.f32.mrf.mxu0
    %737 = vdwg.mxu0
    %vm738 = vcmask 64512
    %739 = vst.msk [vmem:[#allocation11] sm:$0xff] %vm738, %v735
    // Predicated region
    $region42: #{_lambda_.1} parent=1 // pred_check
      _
    $region43: #{_lambda_.1} parent=1 // pred_check_branch
      %741 = sbr.rel (0) target = $region45
    $region44: #{_lambda_.1} parent=1 // pred_region
      %743 = vsyncadd [#allocation4], 0
      %s745 = sshll.u32 [#allocation11], 4
      %s746 = int_to_ptr.vmem [resolvable:$true] %s745
      %s747 = sshll.u32 %s5, 4
      %s748 = int_to_ptr.hbm [resolvable:$true] %s747
      %750 = dma.vmem_to_hbm [thread:$0]  %s746, 128, %s748, [#allocation4]
    $region45: #{_lambda_.1} parent=1 // pred_fallthru
      _
    // Predicated region
    $region46: #{_lambda_.1} parent=1 // pred_check
      _
    $region47: #{_lambda_.1} parent=1 // pred_check_branch
      %752 = sbr.rel (0) target = $region49
    $region48: #{_lambda_.1} parent=1 // pred_region
      %754 = dma.done [#allocation4], 128
    $region49: #{_lambda_.1} parent=1 // pred_fallthru
      _
    %755 = vsyncpa [#allocation3], 1
    %756 = vsyncpa [#allocation6], 1
    %757 = vsyncpa [#allocation9], 1
    %758 = vsyncpa [#allocation4], 1

</llo_original>
